<compile_context>
chip_gen: v7x
topology: tpu7x:2x2x1
jax: 0.10.0
libtpu: 0.0.40
codegen_flags: <defaults>
</compile_context>

<pallas_src>
import functools
import numpy as np

import jax
import jax.numpy as jnp
from jax.experimental import pallas as pl
from jax.experimental.pallas import tpu as pltpu

BN_EPS = 1e-5


def _round_up(v, m):
    return ((v + m - 1) // m) * m


def _pick_batch_tile(n, l, ck, max_unroll):
    """Largest divisor of N such that the (bn, ck, L) im2col block stays ~<=8MiB,
    columns bn*L stay <=4096, and the in-kernel static unroll stays small."""
    col_cap = max(l, min(4096, (2 * 1024 * 1024) // max(ck, 1)))   # in f32 elements
    bn = 1
    for d in range(1, n + 1):
        if n % d == 0 and d <= max_unroll and d * l <= col_cap:
            bn = d
    return bn


# --------------------------- pass 1: partial BN stats ---------------------------
def _stats_kernel(x_ref, w_ref, s_ref, m_ref, *, bn, inv_cols):
    """x_ref: (bn, ck, L)   w_ref: (tc, ck)
       s_ref/m_ref: (1, tc, 1) partial sum / block-centered sum of squares."""
    w = w_ref[...]

    # Column-sum of the INPUT (ck x cols reduction, ~tc/ck cheaper than reducing
    # the output), then a tiny matvec gives the per-channel sum for this block.
    colsum = jnp.sum(x_ref[0], axis=1, keepdims=True)                  # (ck, 1)
    for b in range(1, bn):
        colsum = colsum + jnp.sum(x_ref[b], axis=1, keepdims=True)
    s_blk = jnp.dot(w, colsum, preferred_element_type=jnp.float32)     # (tc, 1)
    mean_blk = s_blk * inv_cols

    # Block-centered sum of squares (numerically stable; combined with Chan's
    # formula in the wrapper).
    m_blk = jnp.zeros_like(s_blk)
    for b in range(bn):
        y = jnp.dot(w, x_ref[b], preferred_element_type=jnp.float32)   # (tc, L)
        d = y - mean_blk
        m_blk = m_blk + jnp.sum(d * d, axis=1, keepdims=True)

    s_ref[0] = s_blk
    m_ref[0] = m_blk


# --------------------------- pass 2: fused conv+BN+ReLU -------------------------
def _emit_kernel(x_ref, w_ref, shift_ref, o_ref, *, bn):
    """x_ref: (bn, ck, L)  w_ref: (tc, ck) BN-scaled weights  shift_ref: (tc, 1)
       o_ref: (bn, tc, L) written once, directly in NCW layout."""
    w = w_ref[...]
    shift = shift_ref[...]
    for b in range(bn):
        y = jnp.dot(w, x_ref[b], preferred_element_type=jnp.float32)   # (tc, L)
        o_ref[b] = jnp.maximum(y + shift, 0.0).astype(o_ref.dtype)


@functools.partial(jax.jit, static_argnames=("kmax", "co_tile", "max_unroll"))
def os_cnn_layer_forward(x, w_merged, gamma, beta, kmax, *, co_tile=256, max_unroll=8):
    """x: (N, C_in, L) f32.  Returns (N, C_out_total, L) f32 (NCW, like torch)."""
    n, c_in, L = x.shape
    c_out = w_merged.shape[0]
    ck = c_in * kmax
    left, right = (kmax - 1) // 2, kmax // 2

    # im2col kept in batch-major order (N, C_in*Kmax, L): pad + stack + reshape,
    # no transpose of the Kmax-inflated tensor, and the kernel writes NCW directly.
    xp = jnp.pad(x, ((0, 0), (0, 0), (left, right)))                    # (N, C_in, L+kmax-1)
    cols = jnp.stack([xp[:, :, k:k + L] for k in range(kmax)], axis=2)  # (N, C_in, kmax, L)
    xim = cols.reshape(n, ck, L).astype(jnp.float32)
    w2 = w_merged.reshape(c_out, ck).astype(jnp.float32)

    # ---- tiling --------------------------------------------------------------
    tc = _round_up(min(int(co_tile), _round_up(c_out, 8)), 8)           # sublane-aligned
    c_out_p = _round_up(c_out, tc)
    bn = _pick_batch_tile(n, L, ck, max_unroll)
    n_b, n_co = n // bn, c_out_p // tc
    cols_blk = bn * L

    # zero-padded C_out rows give s = m = 0, var = 0, gamma_pad = 0 -> benign,
    # sliced off at the end (do not change the padding values).
    w2_p = jnp.pad(w2, ((0, c_out_p - c_out), (0, 0)))
    g_p = jnp.pad(gamma.astype(jnp.float32), (0, c_out_p - c_out))
    b_p = jnp.pad(beta.astype(jnp.float32), (0, c_out_p - c_out))

    # VMEM budget from the actual tile footprint (double-buffered), capped for v7x.
    needed = 2 * 4 * (bn * ck * L + tc * ck + bn * tc * L + 2 * tc)
    vmem_limit = int(min(48 * 1024 * 1024, max(2 * needed, 16 * 1024 * 1024)))
    cparams = pltpu.CompilerParams(
        dimension_semantics=("parallel", "parallel"),
        vmem_limit_bytes=vmem_limit)

    # ---- pass 1: per-(batch-tile, C_out-tile) partial statistics --------------
    s_part, m_part = pl.pallas_call(
        functools.partial(_stats_kernel, bn=bn, inv_cols=1.0 / float(cols_blk)),
        out_shape=(jax.ShapeDtypeStruct((n_b, c_out_p, 1), jnp.float32),
                   jax.ShapeDtypeStruct((n_b, c_out_p, 1), jnp.float32)),
        grid_spec=pltpu.PrefetchScalarGridSpec(
            num_scalar_prefetch=0,
            grid=(n_b, n_co),                       # batch OUTER -> xim DMA'd once
            in_specs=[
                pl.BlockSpec((bn, ck, L), lambda b, i: (b, 0, 0)),   # im2col block
                pl.BlockSpec((tc, ck), lambda b, i: (i, 0)),         # merged weights
            ],
            out_specs=[
                pl.BlockSpec((1, tc, 1), lambda b, i: (b, i, 0)),    # partial sum
                pl.BlockSpec((1, tc, 1), lambda b, i: (b, i, 0)),    # partial centered ss
            ],
        ),
        compiler_params=cparams,
    )(xim, w2_p)

    # ---- fold BN into the weights (tiny per-channel XLA ops) ------------------
    nl_total = float(n * L)
    s_p = s_part[..., 0]                                   # (n_b, c_out_p)
    m_p = m_part[..., 0]
    s_tot = jnp.sum(s_p, axis=0)
    mean = s_tot / nl_total
    mean_b = s_p / float(cols_blk)
    m_tot = jnp.sum(m_p, axis=0) + float(cols_blk) * jnp.sum(
        (mean_b - mean[None, :]) ** 2, axis=0)             # Chan parallel-variance combine
    var = m_tot / nl_total                                 # biased (training-mode BN)
    scale = g_p * jax.lax.rsqrt(var + BN_EPS)
    shift = (b_p - mean * scale).reshape(c_out_p, 1)
    w_scaled = w2_p * scale[:, None]

    # ---- pass 2: relu(scale*W @ xim + shift), written once, directly NCW ------
    out = pl.pallas_call(
        functools.partial(_emit_kernel, bn=bn),
        out_shape=jax.ShapeDtypeStruct((n, c_out_p, L), jnp.float32),
        grid_spec=pltpu.PrefetchScalarGridSpec(
            num_scalar_prefetch=0,
            grid=(n_b, n_co),
            in_specs=[
                pl.BlockSpec((bn, ck, L), lambda b, i: (b, 0, 0)),   # im2col block
                pl.BlockSpec((tc, ck), lambda b, i: (i, 0)),         # BN-scaled weights
                pl.BlockSpec((tc, 1), lambda b, i: (i, 0)),          # BN shift
            ],
            out_specs=pl.BlockSpec((bn, tc, L), lambda b, i: (b, i, 0)),
        ),
        compiler_params=cparams,
    )(xim, w_scaled, shift)

    return out[:, :c_out, :]                               # NCW, no transpose


def build_merged_params(layer_parameters, key):
    """Deterministically init per-branch Conv1d/BN params and merge the branches."""
    kmax = max(p[2] for p in layer_parameters)
    left_max = (kmax - 1) // 2
    c_out_total = sum(p[1] for p in layer_parameters)
    c_in = layer_parameters[0][0]

    w_merged = jnp.zeros((c_out_total, c_in, kmax), jnp.float32)
    gamma = jnp.zeros((c_out_total,), jnp.float32)
    beta = jnp.zeros((c_out_total,), jnp.float32)
    per_branch = []

    off = 0
    for (ci, co, k) in layer_parameters:
        key, kw, kb, kg, kbe = jax.random.split(key, 5)
        w = jax.random.normal(kw, (co, ci, k), jnp.float32) * 0.3
        b = jax.random.normal(kb, (co,), jnp.float32) * 0.1   # conv bias (reference only;
        #                                                       cancelled by training-mode BN)
        g = 1.0 + 0.2 * jax.random.normal(kg, (co,), jnp.float32)
        bt = 0.1 * jax.random.normal(kbe, (co,), jnp.float32)
        tap_off = left_max - (k - 1) // 2     # align each branch's "same" padding
        w_merged = w_merged.at[off:off + co, :, tap_off:tap_off + k].set(w)
        gamma = gamma.at[off:off + co].set(g)
        beta = beta.at[off:off + co].set(bt)
        per_branch.append((w, b, g, bt, k))
        off += co
    return w_merged, gamma, beta, kmax, per_branch


def reference_forward(x, per_branch):
    """Pure-JAX reference matching the PyTorch module exactly (incl. conv bias,
    torch padding convention ((k-1)//2, k//2), training-mode BN)."""
    outs = []
    N, C, L = x.shape
    for (w, b, g, bt, k) in per_branch:
        xp = jnp.pad(x, ((0, 0), (0, 0), ((k - 1) // 2, k // 2)))
        y = jnp.broadcast_to(b[None, :, None], (N, w.shape[0], L)).astype(jnp.float32)
        for kk in range(k):
            y = y + jnp.einsum('oc,ncl->nol', w[:, :, kk], xp[:, :, kk:kk + L])
        mean = y.mean(axis=(0, 2), keepdims=True)
        var = ((y - mean) ** 2).mean(axis=(0, 2), keepdims=True)
        y = (y - mean) * jax.lax.rsqrt(var + BN_EPS)
        y = y * g[None, :, None] + bt[None, :, None]
        outs.append(y)
    return jax.nn.relu(jnp.concatenate(outs, axis=1))


if __name__ == "__main__":
    key = jax.random.PRNGKey(0)
    key, kx = jax.random.split(key)

    # layer_parameters = [(in_ch, out_ch, kernel_size), ...]  (incl. one even K)
    layer_parameters = [(4, 6, 3), (4, 8, 4), (4, 10, 7)]
    N, C_in, L = 2, 4, 16
    x = jax.random.normal(kx, (N, C_in, L), jnp.float32)

    w_m, gamma, beta, kmax, per_branch = build_merged_params(layer_parameters, key)

    out = os_cnn_layer_forward(x, w_m, gamma, beta, kmax)
    out = jax.block_until_ready(out)

    ref = reference_forward(x, per_branch)
    np.testing.assert_allclose(np.asarray(out), np.asarray(ref),
                               atol=2e-4, rtol=2e-4)

    print("KERNEL_OK")
</pallas_src>

<mosaic_0001>
module attributes {stable_mosaic.version = 11 : i64} {
  func.func @_stats_kernel(%arg0: i32, %arg1: i32, %arg2: memref<2x28x16xf32, #tpu.memory_space<vmem>>, %arg3: memref<24x28xf32, #tpu.memory_space<vmem>>, %arg4: memref<1x24x1xf32, #tpu.memory_space<vmem>>, %arg5: memref<1x24x1xf32, #tpu.memory_space<vmem>>) attributes {dimension_semantics = [#tpu.dimension_semantics<parallel>, #tpu.dimension_semantics<parallel>], iteration_bounds = array<i64: 1, 1>, scalar_prefetch = 0 : i64, scratch_operands = 0 : i64, tpu.core_type = #tpu.core_type<tc>, window_params = [{transform_indices = @transform_0, window_bounds = array<i64: 2, 28, 16>}, {transform_indices = @transform_1, window_bounds = array<i64: 24, 28>}, {transform_indices = @transform_2, window_bounds = array<i64: 1, 24, 1>}, {transform_indices = @transform_3, window_bounds = array<i64: 1, 24, 1>}]} {
    %c0 = arith.constant 0 : index
    %c0_0 = arith.constant 0 : index
    %0 = vector.load %arg3[%c0, %c0_0] : memref<24x28xf32, #tpu.memory_space<vmem>>, vector<24x28xf32>
    %c0_1 = arith.constant 0 : index
    %c0_2 = arith.constant 0 : index
    %c0_3 = arith.constant 0 : index
    %1 = vector.load %arg2[%c0_1, %c0_2, %c0_3] : memref<2x28x16xf32, #tpu.memory_space<vmem>>, vector<1x28x16xf32>
    %2 = vector.shape_cast %1 : vector<1x28x16xf32> to vector<28x16xf32>
    %cst = arith.constant dense<0.000000e+00> : vector<28xf32>
    %3 = vector.multi_reduction <add>, %2, %cst [1] : vector<28x16xf32> to vector<28xf32>
    %4 = vector.shape_cast %3 : vector<28xf32> to vector<28x1xf32>
    %c1 = arith.constant 1 : index
    %c0_4 = arith.constant 0 : index
    %c0_5 = arith.constant 0 : index
    %5 = vector.load %arg2[%c1, %c0_4, %c0_5] : memref<2x28x16xf32, #tpu.memory_space<vmem>>, vector<1x28x16xf32>
    %6 = vector.shape_cast %5 : vector<1x28x16xf32> to vector<28x16xf32>
    %cst_6 = arith.constant dense<0.000000e+00> : vector<28xf32>
    %7 = vector.multi_reduction <add>, %6, %cst_6 [1] : vector<28x16xf32> to vector<28xf32>
    %8 = vector.shape_cast %7 : vector<28xf32> to vector<28x1xf32>
    %9 = arith.addf %4, %8 : vector<28x1xf32>
    %cst_7 = arith.constant dense<0.000000e+00> : vector<24x1xf32>
    %10 = tpu.matmul %0, %9, %cst_7 {dimension_numbers = #tpu.dot_dimension_numbers<[1], [0], [0], [1], [0, 0, 1, 1], [], []>} : vector<24x28xf32>, vector<28x1xf32>, vector<24x1xf32> -> vector<24x1xf32>
    %cst_8 = arith.constant 3.125000e-02 : f32
    %11 = vector.broadcast %cst_8 : f32 to vector<24x1xf32>
    %12 = arith.mulf %10, %11 : vector<24x1xf32>
    %cst_9 = arith.constant 0.000000e+00 : f32
    %13 = vector.broadcast %cst_9 : f32 to vector<24x1xf32>
    %c0_10 = arith.constant 0 : index
    %c0_11 = arith.constant 0 : index
    %c0_12 = arith.constant 0 : index
    %14 = vector.load %arg2[%c0_10, %c0_11, %c0_12] : memref<2x28x16xf32, #tpu.memory_space<vmem>>, vector<1x28x16xf32>
    %15 = vector.shape_cast %14 : vector<1x28x16xf32> to vector<28x16xf32>
    %cst_13 = arith.constant dense<0.000000e+00> : vector<24x16xf32>
    %16 = tpu.matmul %0, %15, %cst_13 {dimension_numbers = #tpu.dot_dimension_numbers<[1], [0], [0], [1], [0, 0, 1, 1], [], []>} : vector<24x28xf32>, vector<28x16xf32>, vector<24x16xf32> -> vector<24x16xf32>
    %17 = vector.broadcast %12 : vector<24x1xf32> to vector<24x16xf32>
    %18 = arith.subf %16, %17 : vector<24x16xf32>
    %19 = arith.mulf %18, %18 : vector<24x16xf32>
    %cst_14 = arith.constant dense<0.000000e+00> : vector<24xf32>
    %20 = vector.multi_reduction <add>, %19, %cst_14 [1] : vector<24x16xf32> to vector<24xf32>
    %21 = vector.shape_cast %20 : vector<24xf32> to vector<24x1xf32>
    %22 = arith.addf %13, %21 : vector<24x1xf32>
    %c1_15 = arith.constant 1 : index
    %c0_16 = arith.constant 0 : index
    %c0_17 = arith.constant 0 : index
    %23 = vector.load %arg2[%c1_15, %c0_16, %c0_17] : memref<2x28x16xf32, #tpu.memory_space<vmem>>, vector<1x28x16xf32>
    %24 = vector.shape_cast %23 : vector<1x28x16xf32> to vector<28x16xf32>
    %cst_18 = arith.constant dense<0.000000e+00> : vector<24x16xf32>
    %25 = tpu.matmul %0, %24, %cst_18 {dimension_numbers = #tpu.dot_dimension_numbers<[1], [0], [0], [1], [0, 0, 1, 1], [], []>} : vector<24x28xf32>, vector<28x16xf32>, vector<24x16xf32> -> vector<24x16xf32>
    %26 = vector.broadcast %12 : vector<24x1xf32> to vector<24x16xf32>
    %27 = arith.subf %25, %26 : vector<24x16xf32>
    %28 = arith.mulf %27, %27 : vector<24x16xf32>
    %cst_19 = arith.constant dense<0.000000e+00> : vector<24xf32>
    %29 = vector.multi_reduction <add>, %28, %cst_19 [1] : vector<24x16xf32> to vector<24xf32>
    %30 = vector.shape_cast %29 : vector<24xf32> to vector<24x1xf32>
    %31 = arith.addf %22, %30 : vector<24x1xf32>
    %c0_20 = arith.constant 0 : index
    %c0_21 = arith.constant 0 : index
    %c0_22 = arith.constant 0 : index
    %32 = vector.load %arg4[%c0_20, %c0_21, %c0_22] : memref<1x24x1xf32, #tpu.memory_space<vmem>>, vector<1x24x1xf32>
    %33 = vector.shape_cast %32 : vector<1x24x1xf32> to vector<24x1xf32>
    %34 = vector.shape_cast %10 : vector<24x1xf32> to vector<1x24x1xf32>
    tpu.vector_store %arg4[%c0_20, %c0_21, %c0_22], %34 {strides = array<i32>} : memref<1x24x1xf32, #tpu.memory_space<vmem>>, vector<1x24x1xf32>,
    %c0_23 = arith.constant 0 : index
    %c0_24 = arith.constant 0 : index
    %c0_25 = arith.constant 0 : index
    %35 = vector.load %arg5[%c0_23, %c0_24, %c0_25] : memref<1x24x1xf32, #tpu.memory_space<vmem>>, vector<1x24x1xf32>
    %36 = vector.shape_cast %35 : vector<1x24x1xf32> to vector<24x1xf32>
    %37 = vector.shape_cast %31 : vector<24x1xf32> to vector<1x24x1xf32>
    tpu.vector_store %arg5[%c0_23, %c0_24, %c0_25], %37 {strides = array<i32>} : memref<1x24x1xf32, #tpu.memory_space<vmem>>, vector<1x24x1xf32>,
    return
  }
  func.func @transform_0(%arg0: i32, %arg1: i32) -> (i32, i32, i32) {
    %c0_i32 = arith.constant 0 : i32
    %c0_i32_0 = arith.constant 0 : i32
    %c0_i32_1 = arith.constant 0 : i32
    return %arg0, %c0_i32, %c0_i32_0 : i32, i32, i32
  }
  func.func @transform_1(%arg0: i32, %arg1: i32) -> (i32, i32) {
    %c0_i32 = arith.constant 0 : i32
    %c0_i32_0 = arith.constant 0 : i32
    return %arg1, %c0_i32 : i32, i32
  }
  func.func @transform_2(%arg0: i32, %arg1: i32) -> (i32, i32, i32) {
    %c0_i32 = arith.constant 0 : i32
    %c0_i32_0 = arith.constant 0 : i32
    return %arg0, %arg1, %c0_i32 : i32, i32, i32
  }
  func.func @transform_3(%arg0: i32, %arg1: i32) -> (i32, i32, i32) {
    %c0_i32 = arith.constant 0 : i32
    %c0_i32_0 = arith.constant 0 : i32
    return %arg0, %arg1, %c0_i32 : i32, i32, i32
  }
}

module attributes {stable_mosaic.version = 11 : i64} {
  func.func @_emit_kernel(%arg0: i32, %arg1: i32, %arg2: memref<2x28x16xf32, #tpu.memory_space<vmem>>, %arg3: memref<24x28xf32, #tpu.memory_space<vmem>>, %arg4: memref<24x1xf32, #tpu.memory_space<vmem>>, %arg5: memref<2x24x16xf32, #tpu.memory_space<vmem>>) attributes {dimension_semantics = [#tpu.dimension_semantics<parallel>, #tpu.dimension_semantics<parallel>], iteration_bounds = array<i64: 1, 1>, scalar_prefetch = 0 : i64, scratch_operands = 0 : i64, tpu.core_type = #tpu.core_type<tc>, window_params = [{transform_indices = @transform_0, window_bounds = array<i64: 2, 28, 16>}, {transform_indices = @transform_1, window_bounds = array<i64: 24, 28>}, {transform_indices = @transform_2, window_bounds = array<i64: 24, 1>}, {transform_indices = @transform_3, window_bounds = array<i64: 2, 24, 16>}]} {
    %c0 = arith.constant 0 : index
    %c0_0 = arith.constant 0 : index
    %0 = vector.load %arg3[%c0, %c0_0] : memref<24x28xf32, #tpu.memory_space<vmem>>, vector<24x28xf32>
    %c0_1 = arith.constant 0 : index
    %c0_2 = arith.constant 0 : index
    %1 = vector.load %arg4[%c0_1, %c0_2] : memref<24x1xf32, #tpu.memory_space<vmem>>, vector<24x1xf32>
    %c0_3 = arith.constant 0 : index
    %c0_4 = arith.constant 0 : index
    %c0_5 = arith.constant 0 : index
    %2 = vector.load %arg2[%c0_3, %c0_4, %c0_5] : memref<2x28x16xf32, #tpu.memory_space<vmem>>, vector<1x28x16xf32>
    %3 = vector.shape_cast %2 : vector<1x28x16xf32> to vector<28x16xf32>
    %cst = arith.constant dense<0.000000e+00> : vector<24x16xf32>
    %4 = tpu.matmul %0, %3, %cst {dimension_numbers = #tpu.dot_dimension_numbers<[1], [0], [0], [1], [0, 0, 1, 1], [], []>} : vector<24x28xf32>, vector<28x16xf32>, vector<24x16xf32> -> vector<24x16xf32>
    %5 = vector.broadcast %1 : vector<24x1xf32> to vector<24x16xf32>
    %6 = arith.addf %4, %5 : vector<24x16xf32>
    %cst_6 = arith.constant 0.000000e+00 : f32
    %7 = vector.broadcast %cst_6 : f32 to vector<24x16xf32>
    %8 = arith.maximumf %6, %7 : vector<24x16xf32>
    %c0_7 = arith.constant 0 : index
    %c0_8 = arith.constant 0 : index
    %c0_9 = arith.constant 0 : index
    %9 = vector.load %arg5[%c0_7, %c0_8, %c0_9] : memref<2x24x16xf32, #tpu.memory_space<vmem>>, vector<1x24x16xf32>
    %10 = vector.shape_cast %9 : vector<1x24x16xf32> to vector<24x16xf32>
    %11 = vector.shape_cast %8 : vector<24x16xf32> to vector<1x24x16xf32>
    tpu.vector_store %arg5[%c0_7, %c0_8, %c0_9], %11 {strides = array<i32>} : memref<2x24x16xf32, #tpu.memory_space<vmem>>, vector<1x24x16xf32>,
    %c1 = arith.constant 1 : index
    %c0_10 = arith.constant 0 : index
    %c0_11 = arith.constant 0 : index
    %12 = vector.load %arg2[%c1, %c0_10, %c0_11] : memref<2x28x16xf32, #tpu.memory_space<vmem>>, vector<1x28x16xf32>
    %13 = vector.shape_cast %12 : vector<1x28x16xf32> to vector<28x16xf32>
    %cst_12 = arith.constant dense<0.000000e+00> : vector<24x16xf32>
    %14 = tpu.matmul %0, %13, %cst_12 {dimension_numbers = #tpu.dot_dimension_numbers<[1], [0], [0], [1], [0, 0, 1, 1], [], []>} : vector<24x28xf32>, vector<28x16xf32>, vector<24x16xf32> -> vector<24x16xf32>
    %15 = vector.broadcast %1 : vector<24x1xf32> to vector<24x16xf32>
    %16 = arith.addf %14, %15 : vector<24x16xf32>
    %cst_13 = arith.constant 0.000000e+00 : f32
    %17 = vector.broadcast %cst_13 : f32 to vector<24x16xf32>
    %18 = arith.maximumf %16, %17 : vector<24x16xf32>
    %c1_14 = arith.constant 1 : index
    %c0_15 = arith.constant 0 : index
    %c0_16 = arith.constant 0 : index
    %19 = vector.load %arg5[%c1_14, %c0_15, %c0_16] : memref<2x24x16xf32, #tpu.memory_space<vmem>>, vector<1x24x16xf32>
    %20 = vector.shape_cast %19 : vector<1x24x16xf32> to vector<24x16xf32>
    %21 = vector.shape_cast %18 : vector<24x16xf32> to vector<1x24x16xf32>
    tpu.vector_store %arg5[%c1_14, %c0_15, %c0_16], %21 {strides = array<i32>} : memref<2x24x16xf32, #tpu.memory_space<vmem>>, vector<1x24x16xf32>,
    return
  }
  func.func @transform_0(%arg0: i32, %arg1: i32) -> (i32, i32, i32) {
    %c0_i32 = arith.constant 0 : i32
    %c0_i32_0 = arith.constant 0 : i32
    %c0_i32_1 = arith.constant 0 : i32
    return %arg0, %c0_i32, %c0_i32_0 : i32, i32, i32
  }
  func.func @transform_1(%arg0: i32, %arg1: i32) -> (i32, i32) {
    %c0_i32 = arith.constant 0 : i32
    %c0_i32_0 = arith.constant 0 : i32
    return %arg1, %c0_i32 : i32, i32
  }
  func.func @transform_2(%arg0: i32, %arg1: i32) -> (i32, i32) {
    %c0_i32 = arith.constant 0 : i32
    %c0_i32_0 = arith.constant 0 : i32
    return %arg1, %c0_i32 : i32, i32
  }
  func.func @transform_3(%arg0: i32, %arg1: i32) -> (i32, i32, i32) {
    %c0_i32 = arith.constant 0 : i32
    %c0_i32_0 = arith.constant 0 : i32
    return %arg0, %arg1, %c0_i32 : i32, i32, i32
  }
}

</mosaic_0001>

<llo_original>
// kernel: os_cnn_layer_forward.3
$region0: #{os_cnn_layer_forward.3}
  #allocation0 [shape = 'u32[]', space=smem, size = 0x4, offset = 0x4, fixed_abs, tag = 'smem constant byte address 0x4 - core index']
  #allocation1 [shape = 'u32[144,128]{1,0:T(1,128)}', space=vmem, size = 0x12000, scoped, tag = 'internal scratch']
  %s0 = inlined_call_operand.vmem [shape: f32[2,28,16], index: 0, kind: input, shape index: {}]
  %s1 = inlined_call_operand.vmem [shape: f32[24,28], index: 1, kind: input, shape index: {}]
  %s2 = inlined_call_operand.vmem [shape: f32[24,1], index: 2, kind: input, shape index: {}]
  %s3 = inlined_call_operand.vmem [shape: f32[2,24,16], index: 3, kind: output, shape index: {}]
  %s4 = sld [smem:[#allocation0]]
  $region22: #{os_cnn_layer_forward.3} parent=0
    _
  %s6 = ssub.s32 1, %s4
  %s7 = scalar_select 0, %s6, %s4
  // Predicated region
  $region2: #{os_cnn_layer_forward.3} parent=0 // pred_check
    _
  $region3: #{os_cnn_layer_forward.3} parent=0 // pred_check_branch
    %9 = sbr.rel (0) target = $region5
  $region4: #{os_cnn_layer_forward.3} parent=0 // pred_region
    _
  $region5: #{os_cnn_layer_forward.3} parent=0 // pred_fallthru
    _
  // Predicated region
  $region6: #{os_cnn_layer_forward.3} parent=0 // pred_check
    _
  $region7: #{os_cnn_layer_forward.3} parent=0 // pred_check_branch
    %11 = sbr.rel (0) target = $region9
  $region8: #{os_cnn_layer_forward.3} parent=0 // pred_region
    _
  $region9: #{os_cnn_layer_forward.3} parent=0 // pred_fallthru
    _
  // Predicated region
  $region10: #{os_cnn_layer_forward.3} parent=0 // pred_check
    _
  $region11: #{os_cnn_layer_forward.3} parent=0 // pred_check_branch
    %13 = sbr.rel (0) target = $region13
  $region12: #{os_cnn_layer_forward.3} parent=0 // pred_region
    _
  $region13: #{os_cnn_layer_forward.3} parent=0 // pred_fallthru
    _
  %v14 = vld [vmem:[%s1] sm:$0xff]
  %v15 = vld [vmem:[%s1 + $0x8] sm:$0xff]
  %v16 = vld [vmem:[%s1 + $0x10] sm:$0xff]
  %v17 = vld [vmem:[%s2] sm:$0xff]
  %v18 = vld [vmem:[%s2 + $0x8] sm:$0xff]
  %v19 = vld [vmem:[%s2 + $0x10] sm:$0xff]
  %v20 = vld [vmem:[%s0] sm:$0xff]
  %v21 = vld [vmem:[%s0 + $0x8] sm:$0xff]
  %v22 = vld [vmem:[%s0 + $0x10] sm:$0xff]
  %v23 = vld [vmem:[%s0 + $0x18] sm:$0xf]
  %25 = vset.pattern.permute.xlu0 0
  %26 = vperm.xlu0 %25, %v17
  %v27 = vpop.permute.xlu0 %26
  %30 = vset.pattern.permute.xlu0 0
  %31 = vperm.xlu0 %30, %v18
  %v32 = vpop.permute.xlu0 %31
  %35 = vset.pattern.permute.xlu0 0
  %36 = vperm.xlu0 %35, %v19
  %v37 = vpop.permute.xlu0 %36
  %vm39 = vcmask 228352
  %v41 = vsel %vm39, %v14, 0
  %v44 = vsel %vm39, %v15, 0
  %v47 = vsel %vm39, %v16, 0
  %vm49 = vcmask 1043456
  %v51 = vsel %vm49, %v23, 0
  %53 = vmatprep.subr.mxu0 0.0
  %54 = vmatpush1.msra.mxu0 %v20
  %55 = vmatprep.subr.mxu0 0.0
  %56 = vmatpush1.msra.mxu0 %v21
  %57 = vmatprep.subr.mxu0 0.0
  %58 = vmatpush1.msra.mxu0 %v22
  %59 = vmatprep.subr.mxu0 0.0
  %60 = vmatpush1.msra.mxu0 %v51
  %61 = vmatprep.subr.mxu0 0.0
  %62 = vmatpush1.msra.mxu0 0.0
  %63 = vmatprep.subr.mxu0 0.0
  %64 = vmatpush1.msra.mxu0 0.0
  %65 = vmatprep.subr.mxu0 0.0
  %66 = vmatpush1.msra.mxu0 0.0
  %67 = vmatprep.subr.mxu0 0.0
  %68 = vmatpush1.msra.mxu0 0.0
  %69 = vmatprep.subr.mxu0 0.0
  %70 = vmatpush1.msra.mxu0 0.0
  %71 = vmatprep.subr.mxu0 0.0
  %72 = vmatpush1.msra.mxu0 0.0
  %73 = vmatprep.subr.mxu0 0.0
  %74 = vmatpush1.msra.mxu0 0.0
  %75 = vmatprep.subr.mxu0 0.0
  %76 = vmatpush1.msra.mxu0 0.0
  %77 = vmatprep.subr.mxu0 0.0
  %78 = vmatpush1.msra.mxu0 0.0
  %79 = vmatprep.subr.mxu0 0.0
  %80 = vmatpush1.msra.mxu0 0.0
  %81 = vmatprep.subr.mxu0 0.0
  %82 = vmatpush1.msra.mxu0 0.0
  %83 = vmatprep.subr.mxu0 0.0
  %84 = vmatpush1.msra.mxu0 0.0
  %85 = vmatprep.subr.mxu0 0.0
  %86 = vmatpush1.msra.mxu0 0.0
  %87 = vmatprep.subr.mxu0 0.0
  %88 = vmatpush1.msra.mxu0 0.0
  %89 = vmatprep.subr.mxu0 0.0
  %90 = vmatpush1.msra.mxu0 0.0
  %91 = vmatprep.subr.mxu0 0.0
  %92 = vmatpush1.msra.mxu0 0.0
  %93 = vmatprep.subr.mxu0 0.0
  %94 = vmatpush1.msra.mxu0 0.0
  %95 = vmatprep.subr.mxu0 0.0
  %96 = vmatpush1.msra.mxu0 0.0
  %97 = vmatprep.subr.mxu0 0.0
  %98 = vmatpush1.msra.mxu0 0.0
  %99 = vmatprep.subr.mxu0 0.0
  %100 = vmatpush1.msra.mxu0 0.0
  %101 = vmatprep.subr.mxu0 0.0
  %102 = vmatpush1.msra.mxu0 0.0
  %103 = vmatprep.subr.mxu0 0.0
  %104 = vmatpush1.msra.mxu0 0.0
  %105 = vmatprep.subr.mxu0 0.0
  %106 = vmatpush1.msra.mxu0 0.0
  %107 = vmatprep.subr.mxu0 0.0
  %108 = vmatpush1.msra.mxu0 0.0
  %109 = vmatprep.subr.mxu0 0.0
  %110 = vmatpush1.msra.mxu0 0.0
  %111 = vmatprep.subr.mxu0 0.0
  %112 = vmatpush1.msra.mxu0 0.0
  %113 = vmatprep.subr.mxu0 0.0
  %114 = vmatpush1.msra.mxu0 0.0
  %115 = vmatprep.subr.mxu0 0.0
  %116 = vmatpush1.msra.mxu0 0.0
  %117 = vmatprep.mubr.f32.mxu0 0.0
  %118 = vmatmul.mubr.f32.gmra.mrb[0].mxu0 %v41
  %v119 = vpop.f32.mrb[0].mxu0
  %v120 = vadd.f32 %v27, %v119
  %v121 = vpop.f32.mrb[0].mxu0
  %122 = vmatprep.mubr.f32.mxu0 0.0
  %123 = vmatmul.mubr.f32.gmra.mrb[0].mxu0 %v44
  %v124 = vpop.f32.mrb[0].mxu0
  %v125 = vadd.f32 %v32, %v124
  %v126 = vpop.f32.mrb[0].mxu0
  %127 = vmatprep.mubr.f32.mxu0 0.0
  %128 = vmatmul.mubr.f32.gmra.mrb[0].mxu0 %v47
  %v129 = vpop.f32.mrb[0].mxu0
  %v130 = vadd.f32 %v37, %v129
  %v131 = vpop.f32.mrb[0].mxu0
  %132 = vdwg.mxu0
  %v133 = vmax.f32 %v120, 0.0
  %v134 = vmax.f32 %v125, 0.0
  %v135 = vmax.f32 %v130, 0.0
  %vm136 = vcmask 130048
  %137 = vst.msk [vmem:[%s3] sm:$0xff] %vm136, %v133
  %138 = vst.msk [vmem:[%s3 + $0x8] sm:$0xff] %vm136, %v134
  %139 = vst.msk [vmem:[%s3 + $0x10] sm:$0xff] %vm136, %v135
  %s140 = scalar_lea.vmem %s0, 32
  %v141 = vld [vmem:[%s140] sm:$0xff]
  %v142 = vld [vmem:[%s140 + $0x8] sm:$0xff]
  %v143 = vld [vmem:[%s140 + $0x10] sm:$0xff]
  %v144 = vld [vmem:[%s140 + $0x18] sm:$0xf]
  %v146 = vsel %vm49, %v144, 0
  %148 = vmatprep.subr.mxu0 0.0
  %149 = vmatpush1.msra.mxu0 %v141
  %150 = vmatprep.subr.mxu0 0.0
  %151 = vmatpush1.msra.mxu0 %v142
  %152 = vmatprep.subr.mxu0 0.0
  %153 = vmatpush1.msra.mxu0 %v143
  %154 = vmatprep.subr.mxu0 0.0
  %155 = vmatpush1.msra.mxu0 %v146
  %156 = vmatprep.subr.mxu0 0.0
  %157 = vmatpush1.msra.mxu0 0.0
  %158 = vmatprep.subr.mxu0 0.0
  %159 = vmatpush1.msra.mxu0 0.0
  %160 = vmatprep.subr.mxu0 0.0
  %161 = vmatpush1.msra.mxu0 0.0
  %162 = vmatprep.subr.mxu0 0.0
  %163 = vmatpush1.msra.mxu0 0.0
  %164 = vmatprep.subr.mxu0 0.0
  %165 = vmatpush1.msra.mxu0 0.0
  %166 = vmatprep.subr.mxu0 0.0
  %167 = vmatpush1.msra.mxu0 0.0
  %168 = vmatprep.subr.mxu0 0.0
  %169 = vmatpush1.msra.mxu0 0.0
  %170 = vmatprep.subr.mxu0 0.0
  %171 = vmatpush1.msra.mxu0 0.0
  %172 = vmatprep.subr.mxu0 0.0
  %173 = vmatpush1.msra.mxu0 0.0
  %174 = vmatprep.subr.mxu0 0.0
  %175 = vmatpush1.msra.mxu0 0.0
  %176 = vmatprep.subr.mxu0 0.0
  %177 = vmatpush1.msra.mxu0 0.0
  %178 = vmatprep.subr.mxu0 0.0
  %179 = vmatpush1.msra.mxu0 0.0
  %180 = vmatprep.subr.mxu0 0.0
  %181 = vmatpush1.msra.mxu0 0.0
  %182 = vmatprep.subr.mxu0 0.0
  %183 = vmatpush1.msra.mxu0 0.0
  %184 = vmatprep.subr.mxu0 0.0
  %185 = vmatpush1.msra.mxu0 0.0
  %186 = vmatprep.subr.mxu0 0.0
  %187 = vmatpush1.msra.mxu0 0.0
  %188 = vmatprep.subr.mxu0 0.0
  %189 = vmatpush1.msra.mxu0 0.0
  %190 = vmatprep.subr.mxu0 0.0
  %191 = vmatpush1.msra.mxu0 0.0
  %192 = vmatprep.subr.mxu0 0.0
  %193 = vmatpush1.msra.mxu0 0.0
  %194 = vmatprep.subr.mxu0 0.0
  %195 = vmatpush1.msra.mxu0 0.0
  %196 = vmatprep.subr.mxu0 0.0
  %197 = vmatpush1.msra.mxu0 0.0
  %198 = vmatprep.subr.mxu0 0.0
  %199 = vmatpush1.msra.mxu0 0.0
  %200 = vmatprep.subr.mxu0 0.0
  %201 = vmatpush1.msra.mxu0 0.0
  %202 = vmatprep.subr.mxu0 0.0
  %203 = vmatpush1.msra.mxu0 0.0
  %204 = vmatprep.subr.mxu0 0.0
  %205 = vmatpush1.msra.mxu0 0.0
  %206 = vmatprep.subr.mxu0 0.0
  %207 = vmatpush1.msra.mxu0 0.0
  %208 = vmatprep.subr.mxu0 0.0
  %209 = vmatpush1.msra.mxu0 0.0
  %210 = vmatprep.subr.mxu0 0.0
  %211 = vmatpush1.msra.mxu0 0.0
  %212 = vmatprep.mubr.f32.mxu0 0.0
  %213 = vmatmul.mubr.f32.gmra.mrb[0].mxu0 %v41
  %v214 = vpop.f32.mrb[0].mxu0
  %v215 = vadd.f32 %v27, %v214
  %v216 = vpop.f32.mrb[0].mxu0
  %217 = vmatprep.mubr.f32.mxu0 0.0
  %218 = vmatmul.mubr.f32.gmra.mrb[0].mxu0 %v44
  %v219 = vpop.f32.mrb[0].mxu0
  %v220 = vadd.f32 %v32, %v219
  %v221 = vpop.f32.mrb[0].mxu0
  %222 = vmatprep.mubr.f32.mxu0 0.0
  %223 = vmatmul.mubr.f32.gmra.mrb[0].mxu0 %v47
  %v224 = vpop.f32.mrb[0].mxu0
  %v225 = vadd.f32 %v37, %v224
  %v226 = vpop.f32.mrb[0].mxu0
  %227 = vdwg.mxu0
  %v228 = vmax.f32 %v215, 0.0
  %v229 = vmax.f32 %v220, 0.0
  %v230 = vmax.f32 %v225, 0.0
  %s231 = scalar_lea.vmem %s3, 24
  %232 = vst.msk [vmem:[%s231] sm:$0xff] %vm136, %v228
  %233 = vst.msk [vmem:[%s231 + $0x8] sm:$0xff] %vm136, %v229
  %234 = vst.msk [vmem:[%s231 + $0x10] sm:$0xff] %vm136, %v230
  // Predicated region
  $region14: #{os_cnn_layer_forward.3} parent=0 // pred_check
    _
  $region15: #{os_cnn_layer_forward.3} parent=0 // pred_check_branch
    %236 = sbr.rel (0) target = $region17
  $region16: #{os_cnn_layer_forward.3} parent=0 // pred_region
    _
  $region17: #{os_cnn_layer_forward.3} parent=0 // pred_fallthru
    _
  // Predicated region
  $region18: #{os_cnn_layer_forward.3} parent=0 // pred_check
    _
  $region19: #{os_cnn_layer_forward.3} parent=0 // pred_check_branch
    %238 = sbr.rel (0) target = $region21
  $region20: #{os_cnn_layer_forward.3} parent=0 // pred_region
    _
  $region21: #{os_cnn_layer_forward.3} parent=0 // pred_fallthru
    _

// kernel: os_cnn_layer_forward.2
$region0: #{os_cnn_layer_forward.2}
  #allocation0 [shape = 'u32[]', space=smem, size = 0x4, offset = 0x4, fixed_abs, tag = 'smem constant byte address 0x4 - core index']
  #allocation1 [shape = 'u32[144,128]{1,0:T(1,128)}', space=vmem, size = 0x12000, scoped, tag = 'internal scratch']
  %s0 = inlined_call_operand.vmem [shape: f32[2,28,16], index: 0, kind: input, shape index: {}]
  %s1 = inlined_call_operand.vmem [shape: f32[24,28], index: 1, kind: input, shape index: {}]
  %s2 = inlined_call_operand.vmem [shape: f32[1,24,1], index: 2, kind: output, shape index: {0}]
  %s3 = inlined_call_operand.vmem [shape: f32[1,24,1], index: 3, kind: output, shape index: {1}]
  %4 = xla_tuple %s2, %s3
  %s5 = sld [smem:[#allocation0]]
  $region26: #{os_cnn_layer_forward.2} parent=0
    _
  %s7 = ssub.s32 1, %s5
  %s8 = scalar_select 0, %s7, %s5
  // Predicated region
  $region2: #{os_cnn_layer_forward.2} parent=0 // pred_check
    _
  $region3: #{os_cnn_layer_forward.2} parent=0 // pred_check_branch
    %10 = sbr.rel (0) target = $region5
  $region4: #{os_cnn_layer_forward.2} parent=0 // pred_region
    _
  $region5: #{os_cnn_layer_forward.2} parent=0 // pred_fallthru
    _
  // Predicated region
  $region6: #{os_cnn_layer_forward.2} parent=0 // pred_check
    _
  $region7: #{os_cnn_layer_forward.2} parent=0 // pred_check_branch
    %12 = sbr.rel (0) target = $region9
  $region8: #{os_cnn_layer_forward.2} parent=0 // pred_region
    _
  $region9: #{os_cnn_layer_forward.2} parent=0 // pred_fallthru
    _
  %v13 = vld [vmem:[%s1] sm:$0xff]
  %v14 = vld [vmem:[%s1 + $0x8] sm:$0xff]
  %v15 = vld [vmem:[%s1 + $0x10] sm:$0xff]
  %v16 = vld [vmem:[%s0] sm:$0xff]
  %v17 = vld [vmem:[%s0 + $0x8] sm:$0xff]
  %v18 = vld [vmem:[%s0 + $0x10] sm:$0xff]
  %v19 = vld [vmem:[%s0 + $0x18] sm:$0xf]
  %vm20 = vcmask 130048
  %v21 = vsel %vm20, %v16, 0.0
  %22 = vadd.xlane.f32.xlu0 %v21
  %v23 = vpop.xlane.xlu0 %22
  %v24 = vsel %vm20, %v17, 0.0
  %25 = vadd.xlane.f32.xlu0 %v24
  %v26 = vpop.xlane.xlu0 %25
  %v27 = vsel %vm20, %v18, 0.0
  %28 = vadd.xlane.f32.xlu0 %v27
  %v29 = vpop.xlane.xlu0 %28
  %vm30 = vcmask 125952
  %v31 = vsel %vm30, %v19, 0.0
  %32 = vadd.xlane.f32.xlu0 %v31
  %v33 = vpop.xlane.xlu0 %32
  %s34 = scalar_lea.vmem %s0, 32
  %v35 = vld [vmem:[%s34] sm:$0xff]
  %v36 = vld [vmem:[%s34 + $0x8] sm:$0xff]
  %v37 = vld [vmem:[%s34 + $0x10] sm:$0xff]
  %v38 = vld [vmem:[%s34 + $0x18] sm:$0xf]
  %v39 = vsel %vm20, %v35, 0.0
  %40 = vadd.xlane.f32.xlu0 %v39
  %v41 = vpop.xlane.xlu0 %40
  %v42 = vsel %vm20, %v36, 0.0
  %43 = vadd.xlane.f32.xlu0 %v42
  %v44 = vpop.xlane.xlu0 %43
  %v45 = vsel %vm20, %v37, 0.0
  %46 = vadd.xlane.f32.xlu0 %v45
  %v47 = vpop.xlane.xlu0 %46
  %v48 = vsel %vm30, %v38, 0.0
  %49 = vadd.xlane.f32.xlu0 %v48
  %v50 = vpop.xlane.xlu0 %49
  %v51 = vadd.f32 %v23, %v41
  %v52 = vadd.f32 %v26, %v44
  %v53 = vadd.f32 %v29, %v47
  %v54 = vadd.f32 %v33, %v50
  %vm55 = vcmask 228352
  %v57 = vsel %vm55, %v13, 0
  %v60 = vsel %vm55, %v14, 0
  %v63 = vsel %vm55, %v15, 0
  %vm65 = vcmask 1043456
  %v67 = vsel %vm65, %v54, 0
  %69 = vmatprep.subr.mxu0 0.0
  %70 = vmatpush1.msra.mxu0 %v51
  %71 = vmatprep.subr.mxu0 0.0
  %72 = vmatpush1.msra.mxu0 %v52
  %73 = vmatprep.subr.mxu0 0.0
  %74 = vmatpush1.msra.mxu0 %v53
  %75 = vmatprep.subr.mxu0 0.0
  %76 = vmatpush1.msra.mxu0 %v67
  %77 = vmatprep.subr.mxu0 0.0
  %78 = vmatpush1.msra.mxu0 0.0
  %79 = vmatprep.subr.mxu0 0.0
  %80 = vmatpush1.msra.mxu0 0.0
  %81 = vmatprep.subr.mxu0 0.0
  %82 = vmatpush1.msra.mxu0 0.0
  %83 = vmatprep.subr.mxu0 0.0
  %84 = vmatpush1.msra.mxu0 0.0
  %85 = vmatprep.subr.mxu0 0.0
  %86 = vmatpush1.msra.mxu0 0.0
  %87 = vmatprep.subr.mxu0 0.0
  %88 = vmatpush1.msra.mxu0 0.0
  %89 = vmatprep.subr.mxu0 0.0
  %90 = vmatpush1.msra.mxu0 0.0
  %91 = vmatprep.subr.mxu0 0.0
  %92 = vmatpush1.msra.mxu0 0.0
  %93 = vmatprep.subr.mxu0 0.0
  %94 = vmatpush1.msra.mxu0 0.0
  %95 = vmatprep.subr.mxu0 0.0
  %96 = vmatpush1.msra.mxu0 0.0
  %97 = vmatprep.subr.mxu0 0.0
  %98 = vmatpush1.msra.mxu0 0.0
  %99 = vmatprep.subr.mxu0 0.0
  %100 = vmatpush1.msra.mxu0 0.0
  %101 = vmatprep.subr.mxu0 0.0
  %102 = vmatpush1.msra.mxu0 0.0
  %103 = vmatprep.subr.mxu0 0.0
  %104 = vmatpush1.msra.mxu0 0.0
  %105 = vmatprep.subr.mxu0 0.0
  %106 = vmatpush1.msra.mxu0 0.0
  %107 = vmatprep.subr.mxu0 0.0
  %108 = vmatpush1.msra.mxu0 0.0
  %109 = vmatprep.subr.mxu0 0.0
  %110 = vmatpush1.msra.mxu0 0.0
  %111 = vmatprep.subr.mxu0 0.0
  %112 = vmatpush1.msra.mxu0 0.0
  %113 = vmatprep.subr.mxu0 0.0
  %114 = vmatpush1.msra.mxu0 0.0
  %115 = vmatprep.subr.mxu0 0.0
  %116 = vmatpush1.msra.mxu0 0.0
  %117 = vmatprep.subr.mxu0 0.0
  %118 = vmatpush1.msra.mxu0 0.0
  %119 = vmatprep.subr.mxu0 0.0
  %120 = vmatpush1.msra.mxu0 0.0
  %121 = vmatprep.subr.mxu0 0.0
  %122 = vmatpush1.msra.mxu0 0.0
  %123 = vmatprep.subr.mxu0 0.0
  %124 = vmatpush1.msra.mxu0 0.0
  %125 = vmatprep.subr.mxu0 0.0
  %126 = vmatpush1.msra.mxu0 0.0
  %127 = vmatprep.subr.mxu0 0.0
  %128 = vmatpush1.msra.mxu0 0.0
  %129 = vmatprep.subr.mxu0 0.0
  %130 = vmatpush1.msra.mxu0 0.0
  %131 = vmatprep.subr.mxu0 0.0
  %132 = vmatpush1.msra.mxu0 0.0
  %133 = vmatprep.mubr.f32.mxu0 0.0
  %134 = vmatmul.mubr.f32.gmra.mrb[0].mxu0 %v57
  %v135 = vpop.f32.mrb[0].mxu0
  %v136 = vadd.f32 0.0, %v135
  %v137 = vpop.f32.mrb[0].mxu0
  %138 = vmatprep.mubr.f32.mxu0 0.0
  %139 = vmatmul.mubr.f32.gmra.mrb[0].mxu0 %v60
  %v140 = vpop.f32.mrb[0].mxu0
  %v141 = vadd.f32 0.0, %v140
  %v142 = vpop.f32.mrb[0].mxu0
  %143 = vmatprep.mubr.f32.mxu0 0.0
  %144 = vmatmul.mubr.f32.gmra.mrb[0].mxu0 %v63
  %v145 = vpop.f32.mrb[0].mxu0
  %v146 = vadd.f32 0.0, %v145
  %v147 = vpop.f32.mrb[0].mxu0
  %148 = vdwg.mxu0
  %v149 = vmul.f32 %v136, 0.03125
  %v150 = vmul.f32 %v141, 0.03125
  %v151 = vmul.f32 %v146, 0.03125
  %v153 = vsel %vm65, %v19, 0
  %155 = vmatprep.subr.mxu0 0.0
  %156 = vmatpush1.msra.mxu0 %v16
  %157 = vmatprep.subr.mxu0 0.0
  %158 = vmatpush1.msra.mxu0 %v17
  %159 = vmatprep.subr.mxu0 0.0
  %160 = vmatpush1.msra.mxu0 %v18
  %161 = vmatprep.subr.mxu0 0.0
  %162 = vmatpush1.msra.mxu0 %v153
  %163 = vmatprep.subr.mxu0 0.0
  %164 = vmatpush1.msra.mxu0 0.0
  %165 = vmatprep.subr.mxu0 0.0
  %166 = vmatpush1.msra.mxu0 0.0
  %167 = vmatprep.subr.mxu0 0.0
  %168 = vmatpush1.msra.mxu0 0.0
  %169 = vmatprep.subr.mxu0 0.0
  %170 = vmatpush1.msra.mxu0 0.0
  %171 = vmatprep.subr.mxu0 0.0
  %172 = vmatpush1.msra.mxu0 0.0
  %173 = vmatprep.subr.mxu0 0.0
  %174 = vmatpush1.msra.mxu0 0.0
  %175 = vmatprep.subr.mxu0 0.0
  %176 = vmatpush1.msra.mxu0 0.0
  %177 = vmatprep.subr.mxu0 0.0
  %178 = vmatpush1.msra.mxu0 0.0
  %179 = vmatprep.subr.mxu0 0.0
  %180 = vmatpush1.msra.mxu0 0.0
  %181 = vmatprep.subr.mxu0 0.0
  %182 = vmatpush1.msra.mxu0 0.0
  %183 = vmatprep.subr.mxu0 0.0
  %184 = vmatpush1.msra.mxu0 0.0
  %185 = vmatprep.subr.mxu0 0.0
  %186 = vmatpush1.msra.mxu0 0.0
  %187 = vmatprep.subr.mxu0 0.0
  %188 = vmatpush1.msra.mxu0 0.0
  %189 = vmatprep.subr.mxu0 0.0
  %190 = vmatpush1.msra.mxu0 0.0
  %191 = vmatprep.subr.mxu0 0.0
  %192 = vmatpush1.msra.mxu0 0.0
  %193 = vmatprep.subr.mxu0 0.0
  %194 = vmatpush1.msra.mxu0 0.0
  %195 = vmatprep.subr.mxu0 0.0
  %196 = vmatpush1.msra.mxu0 0.0
  %197 = vmatprep.subr.mxu0 0.0
  %198 = vmatpush1.msra.mxu0 0.0
  %199 = vmatprep.subr.mxu0 0.0
  %200 = vmatpush1.msra.mxu0 0.0
  %201 = vmatprep.subr.mxu0 0.0
  %202 = vmatpush1.msra.mxu0 0.0
  %203 = vmatprep.subr.mxu0 0.0
  %204 = vmatpush1.msra.mxu0 0.0
  %205 = vmatprep.subr.mxu0 0.0
  %206 = vmatpush1.msra.mxu0 0.0
  %207 = vmatprep.subr.mxu0 0.0
  %208 = vmatpush1.msra.mxu0 0.0
  %209 = vmatprep.subr.mxu0 0.0
  %210 = vmatpush1.msra.mxu0 0.0
  %211 = vmatprep.subr.mxu0 0.0
  %212 = vmatpush1.msra.mxu0 0.0
  %213 = vmatprep.subr.mxu0 0.0
  %214 = vmatpush1.msra.mxu0 0.0
  %215 = vmatprep.subr.mxu0 0.0
  %216 = vmatpush1.msra.mxu0 0.0
  %217 = vmatprep.subr.mxu0 0.0
  %218 = vmatpush1.msra.mxu0 0.0
  %219 = vmatprep.mubr.f32.mxu0 0.0
  %220 = vmatmul.mubr.f32.gmra.mrb[0].mxu0 %v57
  %v221 = vpop.f32.mrb[0].mxu0
  %v222 = vadd.f32 0.0, %v221
  %v223 = vpop.f32.mrb[0].mxu0
  %224 = vmatprep.mubr.f32.mxu0 0.0
  %225 = vmatmul.mubr.f32.gmra.mrb[0].mxu0 %v60
  %v226 = vpop.f32.mrb[0].mxu0
  %v227 = vadd.f32 0.0, %v226
  %v228 = vpop.f32.mrb[0].mxu0
  %229 = vmatprep.mubr.f32.mxu0 0.0
  %230 = vmatmul.mubr.f32.gmra.mrb[0].mxu0 %v63
  %v231 = vpop.f32.mrb[0].mxu0
  %v232 = vadd.f32 0.0, %v231
  %v233 = vpop.f32.mrb[0].mxu0
  %234 = vdwg.mxu0
  %236 = vset.pattern.permute.xlu0 0
  %237 = vperm.xlu0 %236, %v149
  %v238 = vpop.permute.xlu0 %237
  %241 = vset.pattern.permute.xlu0 0
  %242 = vperm.xlu0 %241, %v150
  %v243 = vpop.permute.xlu0 %242
  %246 = vset.pattern.permute.xlu0 0
  %247 = vperm.xlu0 %246, %v151
  %v248 = vpop.permute.xlu0 %247
  %v250 = vsub.f32 %v222, %v238
  %v251 = vsub.f32 %v227, %v243
  %v252 = vsub.f32 %v232, %v248
  %v253 = vmul.f32 %v250, %v250
  %v254 = vmul.f32 %v251, %v251
  %v255 = vmul.f32 %v252, %v252
  %v256 = vsel %vm20, %v253, 0.0
  %257 = vadd.xlane.f32.xlu0 %v256
  %v258 = vpop.xlane.xlu0 %257
  %v259 = vsel %vm20, %v254, 0.0
  %260 = vadd.xlane.f32.xlu0 %v259
  %v261 = vpop.xlane.xlu0 %260
  %v262 = vsel %vm20, %v255, 0.0
  %263 = vadd.xlane.f32.xlu0 %v262
  %v264 = vpop.xlane.xlu0 %263
  %v265 = vadd.f32 %v258, 0.0
  %v266 = vadd.f32 %v261, 0.0
  %v267 = vadd.f32 %v264, 0.0
  %v269 = vsel %vm65, %v38, 0
  %271 = vmatprep.subr.mxu0 0.0
  %272 = vmatpush1.msra.mxu0 %v35
  %273 = vmatprep.subr.mxu0 0.0
  %274 = vmatpush1.msra.mxu0 %v36
  %275 = vmatprep.subr.mxu0 0.0
  %276 = vmatpush1.msra.mxu0 %v37
  %277 = vmatprep.subr.mxu0 0.0
  %278 = vmatpush1.msra.mxu0 %v269
  %279 = vmatprep.subr.mxu0 0.0
  %280 = vmatpush1.msra.mxu0 0.0
  %281 = vmatprep.subr.mxu0 0.0
  %282 = vmatpush1.msra.mxu0 0.0
  %283 = vmatprep.subr.mxu0 0.0
  %284 = vmatpush1.msra.mxu0 0.0
  %285 = vmatprep.subr.mxu0 0.0
  %286 = vmatpush1.msra.mxu0 0.0
  %287 = vmatprep.subr.mxu0 0.0
  %288 = vmatpush1.msra.mxu0 0.0
  %289 = vmatprep.subr.mxu0 0.0
  %290 = vmatpush1.msra.mxu0 0.0
  %291 = vmatprep.subr.mxu0 0.0
  %292 = vmatpush1.msra.mxu0 0.0
  %293 = vmatprep.subr.mxu0 0.0
  %294 = vmatpush1.msra.mxu0 0.0
  %295 = vmatprep.subr.mxu0 0.0
  %296 = vmatpush1.msra.mxu0 0.0
  %297 = vmatprep.subr.mxu0 0.0
  %298 = vmatpush1.msra.mxu0 0.0
  %299 = vmatprep.subr.mxu0 0.0
  %300 = vmatpush1.msra.mxu0 0.0
  %301 = vmatprep.subr.mxu0 0.0
  %302 = vmatpush1.msra.mxu0 0.0
  %303 = vmatprep.subr.mxu0 0.0
  %304 = vmatpush1.msra.mxu0 0.0
  %305 = vmatprep.subr.mxu0 0.0
  %306 = vmatpush1.msra.mxu0 0.0
  %307 = vmatprep.subr.mxu0 0.0
  %308 = vmatpush1.msra.mxu0 0.0
  %309 = vmatprep.subr.mxu0 0.0
  %310 = vmatpush1.msra.mxu0 0.0
  %311 = vmatprep.subr.mxu0 0.0
  %312 = vmatpush1.msra.mxu0 0.0
  %313 = vmatprep.subr.mxu0 0.0
  %314 = vmatpush1.msra.mxu0 0.0
  %315 = vmatprep.subr.mxu0 0.0
  %316 = vmatpush1.msra.mxu0 0.0
  %317 = vmatprep.subr.mxu0 0.0
  %318 = vmatpush1.msra.mxu0 0.0
  %319 = vmatprep.subr.mxu0 0.0
  %320 = vmatpush1.msra.mxu0 0.0
  %321 = vmatprep.subr.mxu0 0.0
  %322 = vmatpush1.msra.mxu0 0.0
  %323 = vmatprep.subr.mxu0 0.0
  %324 = vmatpush1.msra.mxu0 0.0
  %325 = vmatprep.subr.mxu0 0.0
  %326 = vmatpush1.msra.mxu0 0.0
  %327 = vmatprep.subr.mxu0 0.0
  %328 = vmatpush1.msra.mxu0 0.0
  %329 = vmatprep.subr.mxu0 0.0
  %330 = vmatpush1.msra.mxu0 0.0
  %331 = vmatprep.subr.mxu0 0.0
  %332 = vmatpush1.msra.mxu0 0.0
  %333 = vmatprep.subr.mxu0 0.0
  %334 = vmatpush1.msra.mxu0 0.0
  %335 = vmatprep.mubr.f32.mxu0 0.0
  %336 = vmatmul.mubr.f32.gmra.mrb[0].mxu0 %v57
  %v337 = vpop.f32.mrb[0].mxu0
  %v338 = vadd.f32 0.0, %v337
  %v339 = vpop.f32.mrb[0].mxu0
  %340 = vmatprep.mubr.f32.mxu0 0.0
  %341 = vmatmul.mubr.f32.gmra.mrb[0].mxu0 %v60
  %v342 = vpop.f32.mrb[0].mxu0
  %v343 = vadd.f32 0.0, %v342
  %v344 = vpop.f32.mrb[0].mxu0
  %345 = vmatprep.mubr.f32.mxu0 0.0
  %346 = vmatmul.mubr.f32.gmra.mrb[0].mxu0 %v63
  %v347 = vpop.f32.mrb[0].mxu0
  %v348 = vadd.f32 0.0, %v347
  %v349 = vpop.f32.mrb[0].mxu0
  %350 = vdwg.mxu0
  %v351 = vsub.f32 %v338, %v238
  %v352 = vsub.f32 %v343, %v243
  %v353 = vsub.f32 %v348, %v248
  %v354 = vmul.f32 %v351, %v351
  %v355 = vmul.f32 %v352, %v352
  %v356 = vmul.f32 %v353, %v353
  %v357 = vsel %vm20, %v354, 0.0
  %358 = vadd.xlane.f32.xlu0 %v357
  %v359 = vpop.xlane.xlu0 %358
  %v360 = vsel %vm20, %v355, 0.0
  %361 = vadd.xlane.f32.xlu0 %v360
  %v362 = vpop.xlane.xlu0 %361
  %v363 = vsel %vm20, %v356, 0.0
  %364 = vadd.xlane.f32.xlu0 %v363
  %v365 = vpop.xlane.xlu0 %364
  %v366 = vadd.f32 %v265, %v359
  %v367 = vadd.f32 %v266, %v362
  %v368 = vadd.f32 %v267, %v365
  %vm369 = vcmask 7168
  %370 = vst.msk [vmem:[%s2] sm:$0xff] %vm369, %v136
  %371 = vst.msk [vmem:[%s2 + $0x8] sm:$0xff] %vm369, %v141
  %372 = vst.msk [vmem:[%s2 + $0x10] sm:$0xff] %vm369, %v146
  %373 = vst.msk [vmem:[%s3] sm:$0xff] %vm369, %v366
  %374 = vst.msk [vmem:[%s3 + $0x8] sm:$0xff] %vm369, %v367
  %375 = vst.msk [vmem:[%s3 + $0x10] sm:$0xff] %vm369, %v368
  // Predicated region
  $region10: #{os_cnn_layer_forward.2} parent=0 // pred_check
    _
  $region11: #{os_cnn_layer_forward.2} parent=0 // pred_check_branch
    %377 = sbr.rel (0) target = $region13
  $region12: #{os_cnn_layer_forward.2} parent=0 // pred_region
    _
  $region13: #{os_cnn_layer_forward.2} parent=0 // pred_fallthru
    _
  // Predicated region
  $region14: #{os_cnn_layer_forward.2} parent=0 // pred_check
    _
  $region15: #{os_cnn_layer_forward.2} parent=0 // pred_check_branch
    %379 = sbr.rel (0) target = $region17
  $region16: #{os_cnn_layer_forward.2} parent=0 // pred_region
    _
  $region17: #{os_cnn_layer_forward.2} parent=0 // pred_fallthru
    _
  // Predicated region
  $region18: #{os_cnn_layer_forward.2} parent=0 // pred_check
    _
  $region19: #{os_cnn_layer_forward.2} parent=0 // pred_check_branch
    %381 = sbr.rel (0) target = $region21
  $region20: #{os_cnn_layer_forward.2} parent=0 // pred_region
    _
  $region21: #{os_cnn_layer_forward.2} parent=0 // pred_fallthru
    _
  // Predicated region
  $region22: #{os_cnn_layer_forward.2} parent=0 // pred_check
    _
  $region23: #{os_cnn_layer_forward.2} parent=0 // pred_check_branch
    %383 = sbr.rel (0) target = $region25
  $region24: #{os_cnn_layer_forward.2} parent=0 // pred_region
    _
  $region25: #{os_cnn_layer_forward.2} parent=0 // pred_fallthru
    _

</llo_original>
